<compile_context>
chip_gen: v5e
topology: v5e:2x2
jax: 0.10.0
libtpu: 0.0.40
codegen_flags: <defaults>
</compile_context>

<pallas_src>
import jax
import jax.numpy as jnp
from jax.experimental import pallas as pl
from jax.experimental.pallas import tpu as pltpu

_NOUT = 8                        # lane-padded width of the final 2-logit projection
_VMEM_CAP = 48 * 1024 * 1024     # stay comfortably under v7x's 64 MiB physical VMEM


def _round_up(x, m):
    return (x + m - 1) // m * m


def _make_kernel(stage_h1):
    def kernel(x_ref, w1_ref, w2_ref, w3_ref, bsh_ref, b3_ref, o_ref, *scratch):
        # Cast the f32 activation tile to bf16 in-kernel (halves x HBM traffic
        # vs. materializing a bf16 copy in the wrapper).
        x = x_ref[...].astype(jnp.bfloat16)

        # Layer 1: Linear (BN1 scale folded into w1 columns) + shift + ReLU.
        h1 = jnp.dot(x, w1_ref[...], preferred_element_type=jnp.float32)
        h1 = jnp.maximum(h1 + bsh_ref[0:1, :], 0.0)
        # Dropout(0.5) -> identity in eval mode.
        h1 = h1.astype(jnp.bfloat16)
        if stage_h1:
            # Large tiles only: stage through VMEM so the layer-2 matmul reads
            # contiguous (8,128)-tiled VMEM instead of scattered register spills.
            h_scr = scratch[0]
            h_scr[...] = h1
            h1 = h_scr[...]

        # Layer 2: Linear (BN2 scale folded) + shift + ReLU.
        h2 = jnp.dot(h1, w2_ref[...], preferred_element_type=jnp.float32)
        h2 = jnp.maximum(h2 + bsh_ref[1:2, :], 0.0)
        # Dropout(0.5) -> identity in eval mode.

        # Layer 3: Linear + bias; only 8 output lanes are written back to HBM
        # (16x less writeback than a 128-wide f32 pad); wrapper slices [:, :2].
        o_ref[...] = (jnp.dot(h2.astype(jnp.bfloat16), w3_ref[...],
                              preferred_element_type=jnp.float32)
                      + b3_ref[...])

    return kernel


def fold_params(params, eps=1e-5):
    """Fold eval-mode BatchNorm into the weights.  Call ONCE at load time."""
    H = params["w1"].shape[0]          # w1 is (H, F) in PyTorch (out, in) layout
    s1 = params["bn1_gamma"] * jax.lax.rsqrt(params["bn1_var"] + eps)
    b1 = params["bn1_beta"] - params["bn1_mean"] * s1
    s2 = params["bn2_gamma"] * jax.lax.rsqrt(params["bn2_var"] + eps)
    b2 = params["bn2_beta"] - params["bn2_mean"] * s2

    # (in, out) layout, BN scale folded into output columns, cast to bf16.
    w1s = (params["w1"].T * s1[None, :]).astype(jnp.bfloat16)         # (F, H)
    w2s = (params["w2"].T * s2[None, :]).astype(jnp.bfloat16)         # (H, H)
    w3p = (jnp.zeros((H, _NOUT), jnp.float32)
           .at[:, :2].set(params["w3"].T)).astype(jnp.bfloat16)       # (H, 8)
    b3p = jnp.zeros((1, _NOUT), jnp.float32).at[0, :2].set(params["b3"])
    bshift = jnp.stack([b1, b2], axis=0).astype(jnp.float32)          # (2, H)
    return {"w1s": w1s, "w2s": w2s, "w3p": w3p, "bshift": bshift, "b3p": b3p}


def _vmem_need(tb, F, H, stage_h1):
    """Rough VMEM budget: single-buffered weights, double-buffered act tiles."""
    weights = (F * H + H * H + H * _NOUT) * 2      # bf16, Buffered(1)
    shifts = (2 * H + _NOUT) * 4                   # f32, Buffered(1)
    x_bufs = 2 * tb * F * 4                        # f32 input tile, 2 buffers
    o_bufs = 2 * tb * _NOUT * 4                    # f32 output tile, 2 buffers
    h_scr = tb * H * 2 if stage_h1 else 0          # bf16 staging scratch
    live = 2 * tb * H * 4                          # f32 h1/h2 live values / spills
    return weights + shifts + x_bufs + o_bufs + h_scr + live


def discriminator_forward(emb, folded, *, block_b=512):
    """Eval-mode forward.  emb: (B, F) f32; folded = fold_params(raw_params).
    Returns (B, 2) f32 logits."""
    B, F = emb.shape
    w1s, w2s, w3p = folded["w1s"], folded["w2s"], folded["w3p"]
    bshift, b3p = folded["bshift"], folded["b3p"]
    H = w1s.shape[1]

    # Batch tile: big tiles amortize the ~0.35 us/step overhead (the kernel is
    # HBM/overhead-bound for realistic F), but keep >=2 grid steps when the
    # batch allows it so v7x can shard the "parallel" axis across its 2 TCs.
    tb = min(block_b, max(8, _round_up(-(-B // 2), 8)))
    stage_h1 = tb * H * 2 > 96 * 1024
    while tb > 8 and _vmem_need(tb, F, H, stage_h1) > _VMEM_CAP:
        tb = max(8, _round_up(tb // 2, 8))
        stage_h1 = tb * H * 2 > 96 * 1024

    B_pad = _round_up(B, tb)
    # Skip the extra HBM pad pass entirely when the batch is already aligned.
    x = emb if B_pad == B else jnp.pad(emb, ((0, B_pad - B), (0, 0)))

    vmem_limit = int(min(max(_vmem_need(tb, F, H, stage_h1) * 5 // 4,
                             32 * 1024 * 1024),
                         56 * 1024 * 1024))

    resident = dict(pipeline_mode=pl.Buffered(1))   # single-buffer constant blocks
    out_pad = pl.pallas_call(
        _make_kernel(stage_h1),
        out_shape=jax.ShapeDtypeStruct((B_pad, _NOUT), jnp.float32),
        grid=(B_pad // tb,),
        in_specs=[
            pl.BlockSpec((tb, F), lambda i: (i, 0)),                 # x tile
            pl.BlockSpec((F, H), lambda i: (0, 0), **resident),      # w1 (resident)
            pl.BlockSpec((H, H), lambda i: (0, 0), **resident),      # w2 (resident)
            pl.BlockSpec((H, _NOUT), lambda i: (0, 0), **resident),  # w3 (resident)
            pl.BlockSpec((2, H), lambda i: (0, 0), **resident),      # BN shifts
            pl.BlockSpec((1, _NOUT), lambda i: (0, 0), **resident),  # b3
        ],
        out_specs=pl.BlockSpec((tb, _NOUT), lambda i: (i, 0)),
        scratch_shapes=([pltpu.VMEM((tb, H), jnp.bfloat16)] if stage_h1 else []),
        compiler_params=pltpu.CompilerParams(
            dimension_semantics=("parallel",),
            vmem_limit_bytes=vmem_limit),
    )(x, w1s, w2s, w3p, bshift, b3p)

    return out_pad[:B, :2]


def _matched_reference(emb, folded):
    """Pure-JAX reference using the exact same folding / bf16 casts as the kernel."""
    x = emb.astype(jnp.bfloat16)
    h1 = jnp.dot(x, folded["w1s"], preferred_element_type=jnp.float32)
    h1 = jnp.maximum(h1 + folded["bshift"][0:1, :], 0.0).astype(jnp.bfloat16)
    h2 = jnp.dot(h1, folded["w2s"], preferred_element_type=jnp.float32)
    h2 = jnp.maximum(h2 + folded["bshift"][1:2, :], 0.0).astype(jnp.bfloat16)
    out = jnp.dot(h2, folded["w3p"], preferred_element_type=jnp.float32) + folded["b3p"]
    return out[:, :2]


def _f32_reference(emb, params):
    """Pure-f32 eval-mode reference of the original PyTorch module."""
    eps = 1e-5
    h = emb @ params["w1"].T
    h = (h - params["bn1_mean"]) / jnp.sqrt(params["bn1_var"] + eps)
    h = h * params["bn1_gamma"] + params["bn1_beta"]
    h = jnp.maximum(h, 0.0)
    h = h @ params["w2"].T
    h = (h - params["bn2_mean"]) / jnp.sqrt(params["bn2_var"] + eps)
    h = h * params["bn2_gamma"] + params["bn2_beta"]
    h = jnp.maximum(h, 0.0)
    return h @ params["w3"].T + params["b3"]


def init_params(key, feature_dim):
    F = feature_dim
    H = 2 * F
    ks = jax.random.split(key, 8)

    def kaiming_uniform(k, out_f, in_f):
        bound = 1.0 / jnp.sqrt(in_f)
        return jax.random.uniform(k, (out_f, in_f), jnp.float32, -bound, bound)

    return {
        "w1": kaiming_uniform(ks[0], H, F),
        "w2": kaiming_uniform(ks[1], H, H),
        "w3": kaiming_uniform(ks[2], 2, H),
        "b3": jax.random.uniform(ks[3], (2,), jnp.float32,
                                 -1.0 / jnp.sqrt(H), 1.0 / jnp.sqrt(H)),
        "bn1_gamma": 1.0 + 0.1 * jax.random.normal(ks[4], (H,), jnp.float32),
        "bn1_beta": 0.05 * jax.random.normal(ks[5], (H,), jnp.float32),
        "bn1_mean": jnp.zeros((H,), jnp.float32),
        "bn1_var": jnp.ones((H,), jnp.float32),
        "bn2_gamma": 1.0 + 0.1 * jax.random.normal(ks[6], (H,), jnp.float32),
        "bn2_beta": 0.05 * jax.random.normal(ks[7], (H,), jnp.float32),
        "bn2_mean": jnp.zeros((H,), jnp.float32),
        "bn2_var": jnp.ones((H,), jnp.float32),
    }


if __name__ == "__main__":
    key = jax.random.PRNGKey(0)
    k_param, k_x = jax.random.split(key)

    feature_dim = 32
    batch = 16          # gives a 2-step "parallel" grid (tb=8)

    params = init_params(k_param, feature_dim)
    folded = fold_params(params)   # fold BN / cast to bf16 once, at load time
    emb = jax.random.normal(k_x, (batch, feature_dim), jnp.float32)

    out = discriminator_forward(emb, folded)
    out = jax.block_until_ready(out)
    assert out.shape == (batch, 2)

    # Tight check against a reference that uses identical bf16 folding.
    ref_matched = _matched_reference(emb, folded)
    assert jnp.allclose(out, ref_matched, atol=1e-3, rtol=1e-3), \
        "mismatch vs matched-precision reference"

    # Looser check against the pure-f32 eval-mode module semantics.
    # (bf16 inference contract: error grows ~sqrt(K)*2^-8 with feature_dim.)
    ref_f32 = _f32_reference(emb, params)
    assert jnp.allclose(out, ref_f32, atol=5e-2, rtol=5e-2), \
        "mismatch vs f32 reference"

    print("KERNEL_OK")
</pallas_src>

<mosaic_0001>
module attributes {stable_mosaic.version = 11 : i64} {
  func.func @kernel(%arg0: i32, %arg1: memref<8x32xf32, #tpu.memory_space<vmem>>, %arg2: memref<32x64xbf16, #tpu.memory_space<vmem>>, %arg3: memref<64x64xbf16, #tpu.memory_space<vmem>>, %arg4: memref<64x8xbf16, #tpu.memory_space<vmem>>, %arg5: memref<2x64xf32, #tpu.memory_space<vmem>>, %arg6: memref<1x8xf32, #tpu.memory_space<vmem>>, %arg7: memref<8x8xf32, #tpu.memory_space<vmem>>) attributes {dimension_semantics = [#tpu.dimension_semantics<parallel>], iteration_bounds = array<i64: 2>, scalar_prefetch = 0 : i64, scratch_operands = 0 : i64, tpu.core_type = #tpu.core_type<tc>, window_params = [{transform_indices = @transform_0, window_bounds = array<i64: 8, 32>}, {pipeline_mode = #tpu.pipeline_mode<synchronous>, transform_indices = @transform_1, window_bounds = array<i64: 32, 64>}, {pipeline_mode = #tpu.pipeline_mode<synchronous>, transform_indices = @transform_2, window_bounds = array<i64: 64, 64>}, {pipeline_mode = #tpu.pipeline_mode<synchronous>, transform_indices = @transform_3, window_bounds = array<i64: 64, 8>}, {pipeline_mode = #tpu.pipeline_mode<synchronous>, transform_indices = @transform_4, window_bounds = array<i64: 2, 64>}, {pipeline_mode = #tpu.pipeline_mode<synchronous>, transform_indices = @transform_5, window_bounds = array<i64: 1, 8>}, {transform_indices = @transform_6, window_bounds = array<i64: 8, 8>}]} {
    %c0 = arith.constant 0 : index
    %c0_0 = arith.constant 0 : index
    %0 = vector.load %arg1[%c0, %c0_0] : memref<8x32xf32, #tpu.memory_space<vmem>>, vector<8x32xf32>
    %1 = arith.truncf %0 : vector<8x32xf32> to vector<8x32xbf16>
    %c0_1 = arith.constant 0 : index
    %c0_2 = arith.constant 0 : index
    %2 = vector.load %arg2[%c0_1, %c0_2] : memref<32x64xbf16, #tpu.memory_space<vmem>>, vector<32x64xbf16>
    %cst = arith.constant dense<0.000000e+00> : vector<8x64xf32>
    %3 = tpu.matmul %1, %2, %cst {dimension_numbers = #tpu.dot_dimension_numbers<[1], [0], [0], [1], [0, 0, 1, 1], [], []>} : vector<8x32xbf16>, vector<32x64xbf16>, vector<8x64xf32> -> vector<8x64xf32>
    %c0_3 = arith.constant 0 : index
    %c0_4 = arith.constant 0 : index
    %4 = vector.load %arg5[%c0_3, %c0_4] : memref<2x64xf32, #tpu.memory_space<vmem>>, vector<1x64xf32>
    %5 = vector.broadcast %4 : vector<1x64xf32> to vector<8x64xf32>
    %6 = arith.addf %3, %5 : vector<8x64xf32>
    %cst_5 = arith.constant 0.000000e+00 : f32
    %7 = vector.broadcast %cst_5 : f32 to vector<8x64xf32>
    %8 = arith.maximumf %6, %7 : vector<8x64xf32>
    %9 = arith.truncf %8 : vector<8x64xf32> to vector<8x64xbf16>
    %c0_6 = arith.constant 0 : index
    %c0_7 = arith.constant 0 : index
    %10 = vector.load %arg3[%c0_6, %c0_7] : memref<64x64xbf16, #tpu.memory_space<vmem>>, vector<64x64xbf16>
    %cst_8 = arith.constant dense<0.000000e+00> : vector<8x64xf32>
    %11 = tpu.matmul %9, %10, %cst_8 {dimension_numbers = #tpu.dot_dimension_numbers<[1], [0], [0], [1], [0, 0, 1, 1], [], []>} : vector<8x64xbf16>, vector<64x64xbf16>, vector<8x64xf32> -> vector<8x64xf32>
    %c1 = arith.constant 1 : index
    %c0_9 = arith.constant 0 : index
    %12 = vector.load %arg5[%c1, %c0_9] : memref<2x64xf32, #tpu.memory_space<vmem>>, vector<1x64xf32>
    %13 = vector.broadcast %12 : vector<1x64xf32> to vector<8x64xf32>
    %14 = arith.addf %11, %13 : vector<8x64xf32>
    %cst_10 = arith.constant 0.000000e+00 : f32
    %15 = vector.broadcast %cst_10 : f32 to vector<8x64xf32>
    %16 = arith.maximumf %14, %15 : vector<8x64xf32>
    %17 = arith.truncf %16 : vector<8x64xf32> to vector<8x64xbf16>
    %c0_11 = arith.constant 0 : index
    %c0_12 = arith.constant 0 : index
    %18 = vector.load %arg4[%c0_11, %c0_12] : memref<64x8xbf16, #tpu.memory_space<vmem>>, vector<64x8xbf16>
    %cst_13 = arith.constant dense<0.000000e+00> : vector<8x8xf32>
    %19 = tpu.matmul %17, %18, %cst_13 {dimension_numbers = #tpu.dot_dimension_numbers<[1], [0], [0], [1], [0, 0, 1, 1], [], []>} : vector<8x64xbf16>, vector<64x8xbf16>, vector<8x8xf32> -> vector<8x8xf32>
    %c0_14 = arith.constant 0 : index
    %c0_15 = arith.constant 0 : index
    %20 = vector.load %arg6[%c0_14, %c0_15] : memref<1x8xf32, #tpu.memory_space<vmem>>, vector<1x8xf32>
    %21 = vector.broadcast %20 : vector<1x8xf32> to vector<8x8xf32>
    %22 = arith.addf %19, %21 : vector<8x8xf32>
    %c0_16 = arith.constant 0 : index
    %c0_17 = arith.constant 0 : index
    %23 = vector.load %arg7[%c0_16, %c0_17] : memref<8x8xf32, #tpu.memory_space<vmem>>, vector<8x8xf32>
    tpu.vector_store %arg7[%c0_16, %c0_17], %22 {strides = array<i32>} : memref<8x8xf32, #tpu.memory_space<vmem>>, vector<8x8xf32>,
    return
  }
  func.func @transform_0(%arg0: i32) -> (i32, i32) {
    %c0_i32 = arith.constant 0 : i32
    %c0_i32_0 = arith.constant 0 : i32
    return %arg0, %c0_i32 : i32, i32
  }
  func.func @transform_1(%arg0: i32) -> (i32, i32) {
    %c0_i32 = arith.constant 0 : i32
    %c0_i32_0 = arith.constant 0 : i32
    %c0_i32_1 = arith.constant 0 : i32
    return %c0_i32, %c0_i32_0 : i32, i32
  }
  func.func @transform_2(%arg0: i32) -> (i32, i32) {
    %c0_i32 = arith.constant 0 : i32
    %c0_i32_0 = arith.constant 0 : i32
    %c0_i32_1 = arith.constant 0 : i32
    return %c0_i32, %c0_i32_0 : i32, i32
  }
  func.func @transform_3(%arg0: i32) -> (i32, i32) {
    %c0_i32 = arith.constant 0 : i32
    %c0_i32_0 = arith.constant 0 : i32
    %c0_i32_1 = arith.constant 0 : i32
    return %c0_i32, %c0_i32_0 : i32, i32
  }
  func.func @transform_4(%arg0: i32) -> (i32, i32) {
    %c0_i32 = arith.constant 0 : i32
    %c0_i32_0 = arith.constant 0 : i32
    %c0_i32_1 = arith.constant 0 : i32
    return %c0_i32, %c0_i32_0 : i32, i32
  }
  func.func @transform_5(%arg0: i32) -> (i32, i32) {
    %c0_i32 = arith.constant 0 : i32
    %c0_i32_0 = arith.constant 0 : i32
    %c0_i32_1 = arith.constant 0 : i32
    return %c0_i32, %c0_i32_0 : i32, i32
  }
  func.func @transform_6(%arg0: i32) -> (i32, i32) {
    %c0_i32 = arith.constant 0 : i32
    %c0_i32_0 = arith.constant 0 : i32
    return %arg0, %c0_i32 : i32, i32
  }
}

</mosaic_0001>

<llo_original>
// kernel: tpu_custom_call.1
$region0: #{tpu_custom_call.1}
  #allocation0 [shape = 'u32[]', space=smem, size = 0x4, offset = 0x4, fixed_abs, tag = 'smem constant byte address 0x4 - core index']
  #allocation1 [shape = 'u32[72,128]{1,0:T(1,128)}', space=vmem, size = 0x9000, scoped, tag = 'internal scratch']
  %s0 = inlined_call_operand.hbm [shape: f32[16,32], index: 0, kind: input, shape index: {}]
  %s1 = inlined_call_operand.hbm [shape: bf16[32,64], index: 1, kind: input, shape index: {}]
  %s2 = inlined_call_operand.vmem [shape: bf16[64,64], index: 2, kind: input, shape index: {}]
  %s3 = inlined_call_operand.vmem [shape: bf16[64,8], index: 3, kind: input, shape index: {}]
  %s4 = inlined_call_operand.vmem [shape: f32[2,64], index: 4, kind: input, shape index: {}]
  %s5 = inlined_call_operand.vmem [shape: f32[1,8], index: 5, kind: input, shape index: {}]
  %s6 = inlined_call_operand.vmem [shape: f32[16,8], index: 6, kind: output, shape index: {}]
  %s7 = sld [smem:[#allocation0]]
  $region65: #{tpu_custom_call.1} parent=0
    _
  %s9 = ssub.s32 1, %s7
  %s10 = scalar_select 0, %s9, %s7
  $region1: #{tpu_custom_call.1} parent=0
    #allocation2 [shape = 'u8[8192]{0}', space=vmem, size = 0x2000, scoped, tag = 'input window, operand 0']
    #allocation3 [shape = 's32[2]{0}', space=sflag, size = 0x8, scoped, tag = 'scoped memory for tpu_custom_call.1']
    #allocation4 [shape = 'u8[8192]{0}', space=vmem, size = 0x2000, scoped, tag = 'input window, operand 1, single buffered']
    #allocation5 [shape = 's32[1]{0}', space=sflag, size = 0x4, scoped, tag = 'scoped memory for tpu_custom_call.1']
    %11 = vsyncpa [#allocation3], 0
    %s12 = scalar_lea.sflag [#allocation3], 1
    %13 = vsyncpa %s12, 0
    %14 = vsyncpa [#allocation5], 0
    loop: start=0, step=1, limit=4
    $region2: #{tpu_custom_call.1} parent=1 // loop_pre_header
      _
    $region3: #{tpu_custom_call.1} parent=1 // loop_header
      %s16 = sphi 0, %s20
      %p17 = scmp.ge.s32.totalorder %s16, 4
      %s26 = sphi 0, %s28
      %s29 = sphi 0, %s26
      %s30 = sphi 0, %s29
      %s46 = sphi 0, %s30
      %s50 = sphi 0, %s50
      %s52 = sphi 0, %s50
      %s53 = sphi 0, %s52
      %s67 = sphi 0, %s53
      %s71 = sphi 0, %s71
      %s73 = sphi 0, %s71
      %s74 = sphi 0, %s73
      %s88 = sphi 0, %s74
      %s92 = sphi 0, %s92
      %s94 = sphi 0, %s92
      %s95 = sphi 0, %s94
      %s109 = sphi 0, %s95
      %s113 = sphi 0, %s113
      %s115 = sphi 0, %s113
      %s116 = sphi 0, %s115
      %s130 = sphi 0, %s116
      %s134 = sphi 0, %s134
      %s136 = sphi 0, %s134
      %s137 = sphi 0, %s136
      %s151 = sphi 0, %s137
      %s157 = sphi 0, %s159
      %s160 = sphi 0, %s157
      %s161 = sphi 0, %s160
      %s177 = sphi 0, %s161
    $region4: #{tpu_custom_call.1} parent=1 // loop_header_branch
      %19 = sbr.rel (%p17) target = $region8
    $region5: #{tpu_custom_call.1} parent=1 // loop_body
      %s21 = ssub.s32 %s16, 1
      %s22 = ssub.s32 %s16, 2
      %s23 = sadd.s32 %s16, 1
      %s24 = ssub.s32 %s16, %s23
      %p25 = scmp.eq.s32.totalorder %s24, 0
      %s27 = sadd.s32 %s26, 1
      %s28 = scalar_select %p25, %s26, %s27
      %p31 = pneg %p25
      %p32 = scmp.eq.s32.totalorder %s16, 1
      %p33 = por %p31, %p32
      %p34 = scmp.ne.s32.totalorder %s26, %s29
      %p35 = scmp.eq.s32.totalorder %s16, 0
      %p36 = por %p34, %p35
      %p37 = scmp.ne.s32.totalorder %s26, %s29
      %p38 = scmp.eq.s32.totalorder %s21, 1
      %p39 = por %p37, %p38
      %p40 = scmp.ne.s32.totalorder %s29, %s30
      %p41 = scmp.eq.s32.totalorder %s21, 0
      %p42 = por %p40, %p41
      %p43 = scmp.ne.s32.totalorder %s29, %s30
      %p44 = scmp.eq.s32.totalorder %s22, 1
      %p45 = por %p43, %p44
      %p47 = scmp.ne.s32.totalorder %s30, %s46
      %p48 = scmp.eq.s32.totalorder %s22, 0
      %p49 = por %p47, %p48
      %s51 = sadd.s32 %s50, 1
      %p54 = scmp.eq.s32.totalorder %s16, 1
      %p55 = scmp.ne.s32.totalorder %s50, %s52
      %p56 = scmp.eq.s32.totalorder %s16, 0
      %p57 = por %p55, %p56
      %p58 = scmp.ne.s32.totalorder %s50, %s52
      %p59 = scmp.eq.s32.totalorder %s21, 1
      %p60 = por %p58, %p59
      %p61 = scmp.ne.s32.totalorder %s52, %s53
      %p62 = scmp.eq.s32.totalorder %s21, 0
      %p63 = por %p61, %p62
      %p64 = scmp.ne.s32.totalorder %s52, %s53
      %p65 = scmp.eq.s32.totalorder %s22, 1
      %p66 = por %p64, %p65
      %p68 = scmp.ne.s32.totalorder %s53, %s67
      %p69 = scmp.eq.s32.totalorder %s22, 0
      %p70 = por %p68, %p69
      %s72 = sadd.s32 %s71, 1
      %p75 = scmp.eq.s32.totalorder %s16, 1
      %p76 = scmp.ne.s32.totalorder %s71, %s73
      %p77 = scmp.eq.s32.totalorder %s16, 0
      %p78 = por %p76, %p77
      %p79 = scmp.ne.s32.totalorder %s71, %s73
      %p80 = scmp.eq.s32.totalorder %s21, 1
      %p81 = por %p79, %p80
      %p82 = scmp.ne.s32.totalorder %s73, %s74
      %p83 = scmp.eq.s32.totalorder %s21, 0
      %p84 = por %p82, %p83
      %p85 = scmp.ne.s32.totalorder %s73, %s74
      %p86 = scmp.eq.s32.totalorder %s22, 1
      %p87 = por %p85, %p86
      %p89 = scmp.ne.s32.totalorder %s74, %s88
      %p90 = scmp.eq.s32.totalorder %s22, 0
      %p91 = por %p89, %p90
      %s93 = sadd.s32 %s92, 1
      %p96 = scmp.eq.s32.totalorder %s16, 1
      %p97 = scmp.ne.s32.totalorder %s92, %s94
      %p98 = scmp.eq.s32.totalorder %s16, 0
      %p99 = por %p97, %p98
      %p100 = scmp.ne.s32.totalorder %s92, %s94
      %p101 = scmp.eq.s32.totalorder %s21, 1
      %p102 = por %p100, %p101
      %p103 = scmp.ne.s32.totalorder %s94, %s95
      %p104 = scmp.eq.s32.totalorder %s21, 0
      %p105 = por %p103, %p104
      %p106 = scmp.ne.s32.totalorder %s94, %s95
      %p107 = scmp.eq.s32.totalorder %s22, 1
      %p108 = por %p106, %p107
      %p110 = scmp.ne.s32.totalorder %s95, %s109
      %p111 = scmp.eq.s32.totalorder %s22, 0
      %p112 = por %p110, %p111
      %s114 = sadd.s32 %s113, 1
      %p117 = scmp.eq.s32.totalorder %s16, 1
      %p118 = scmp.ne.s32.totalorder %s113, %s115
      %p119 = scmp.eq.s32.totalorder %s16, 0
      %p120 = por %p118, %p119
      %p121 = scmp.ne.s32.totalorder %s113, %s115
      %p122 = scmp.eq.s32.totalorder %s21, 1
      %p123 = por %p121, %p122
      %p124 = scmp.ne.s32.totalorder %s115, %s116
      %p125 = scmp.eq.s32.totalorder %s21, 0
      %p126 = por %p124, %p125
      %p127 = scmp.ne.s32.totalorder %s115, %s116
      %p128 = scmp.eq.s32.totalorder %s22, 1
      %p129 = por %p127, %p128
      %p131 = scmp.ne.s32.totalorder %s116, %s130
      %p132 = scmp.eq.s32.totalorder %s22, 0
      %p133 = por %p131, %p132
      %s135 = sadd.s32 %s134, 1
      %p138 = scmp.eq.s32.totalorder %s16, 1
      %p139 = scmp.ne.s32.totalorder %s134, %s136
      %p140 = scmp.eq.s32.totalorder %s16, 0
      %p141 = por %p139, %p140
      %p142 = scmp.ne.s32.totalorder %s134, %s136
      %p143 = scmp.eq.s32.totalorder %s21, 1
      %p144 = por %p142, %p143
      %p145 = scmp.ne.s32.totalorder %s136, %s137
      %p146 = scmp.eq.s32.totalorder %s21, 0
      %p147 = por %p145, %p146
      %p148 = scmp.ne.s32.totalorder %s136, %s137
      %p149 = scmp.eq.s32.totalorder %s22, 1
      %p150 = por %p148, %p149
      %p152 = scmp.ne.s32.totalorder %s137, %s151
      %p153 = scmp.eq.s32.totalorder %s22, 0
      %p154 = por %p152, %p153
      %s155 = ssub.s32 %s16, %s23
      %p156 = scmp.eq.s32.totalorder %s155, 0
      %s158 = sadd.s32 %s157, 1
      %s159 = scalar_select %p156, %s157, %s158
      %p162 = pneg %p156
      %p163 = scmp.eq.s32.totalorder %s16, 1
      %p164 = por %p162, %p163
      %p165 = scmp.ne.s32.totalorder %s157, %s160
      %p166 = scmp.eq.s32.totalorder %s16, 0
      %p167 = por %p165, %p166
      %p168 = scmp.ne.s32.totalorder %s157, %s160
      %p169 = scmp.eq.s32.totalorder %s21, 1
      %p170 = por %p168, %p169
      %p171 = scmp.ne.s32.totalorder %s160, %s161
      %p172 = scmp.eq.s32.totalorder %s21, 0
      %p173 = por %p171, %p172
      %p174 = scmp.ne.s32.totalorder %s160, %s161
      %p175 = scmp.eq.s32.totalorder %s22, 1
      %p176 = por %p174, %p175
      %p178 = scmp.ne.s32.totalorder %s161, %s177
      %p179 = scmp.eq.s32.totalorder %s22, 0
      %p180 = por %p178, %p179
      %p181 = scmp.le.s32.totalorder 1, %s16
      %p182 = scmp.lt.s32.totalorder %s16, 3
      %p183 = pnand %p181, %p182
      %p184 = pneg %p183
      // Predicated region
      $region9: #{tpu_custom_call.1} parent=5 // pred_check
        _
      $region10: #{tpu_custom_call.1} parent=5 // pred_check_branch
        %186 = sbr.rel (%p183) target = $region12
      $region11: #{tpu_custom_call.1} parent=5 // pred_region
        %s187 = ssub.s32 %s16, 1
        // Predicated region
        $region13: #{tpu_custom_call.1} parent=11 // pred_check
          %p188 = pneg %p63
        $region14: #{tpu_custom_call.1} parent=11 // pred_check_branch
          %190 = sbr.rel (%p188) target = $region16
        $region15: #{tpu_custom_call.1} parent=11 // pred_region
          %192 = vsyncadd [#allocation5], 0
          %s193 = sshll.u32 %s1, 4
          %s194 = int_to_ptr.hbm [resolvable:$true] %s193
          %s195 = sshll.u32 [#allocation4], 4
          %s196 = int_to_ptr.vmem [resolvable:$true] %s195
          %201 = dma.hbm_to_vmem [thread:$0]  %s194, 256, %s196, [#allocation5], 64, 64, 4
        $region16: #{tpu_custom_call.1} parent=11 // pred_fallthru
          _
        // Predicated region
        $region17: #{tpu_custom_call.1} parent=11 // pred_check
          %p202 = pneg %p84
        $region18: #{tpu_custom_call.1} parent=11 // pred_check_branch
          %204 = sbr.rel (%p202) target = $region20
        $region19: #{tpu_custom_call.1} parent=11 // pred_region
          _
        $region20: #{tpu_custom_call.1} parent=11 // pred_fallthru
          _
        // Predicated region
        $region21: #{tpu_custom_call.1} parent=11 // pred_check
          %p205 = pneg %p105
        $region22: #{tpu_custom_call.1} parent=11 // pred_check_branch
          %207 = sbr.rel (%p205) target = $region24
        $region23: #{tpu_custom_call.1} parent=11 // pred_region
          _
        $region24: #{tpu_custom_call.1} parent=11 // pred_fallthru
          _
        // Predicated region
        $region25: #{tpu_custom_call.1} parent=11 // pred_check
          %p208 = pneg %p126
        $region26: #{tpu_custom_call.1} parent=11 // pred_check_branch
          %210 = sbr.rel (%p208) target = $region28
        $region27: #{tpu_custom_call.1} parent=11 // pred_region
          _
        $region28: #{tpu_custom_call.1} parent=11 // pred_fallthru
          _
        // Predicated region
        $region29: #{tpu_custom_call.1} parent=11 // pred_check
          %p211 = pneg %p147
        $region30: #{tpu_custom_call.1} parent=11 // pred_check_branch
          %213 = sbr.rel (%p211) target = $region32
        $region31: #{tpu_custom_call.1} parent=11 // pred_region
          _
        $region32: #{tpu_custom_call.1} parent=11 // pred_fallthru
          _
      $region12: #{tpu_custom_call.1} parent=5 // pred_fallthru
        _
      %p214 = scmp.lt.s32.totalorder %s16, 2
      // Predicated region
      $region33: #{tpu_custom_call.1} parent=5 // pred_check
        %p215 = pneg %p214
      $region34: #{tpu_custom_call.1} parent=5 // pred_check_branch
        %217 = sbr.rel (%p215) target = $region36
      $region35: #{tpu_custom_call.1} parent=5 // pred_region
        // Predicated region
        $region37: #{tpu_custom_call.1} parent=35 // pred_check
          %p218 = pneg %p36
        $region38: #{tpu_custom_call.1} parent=35 // pred_check_branch
          %220 = sbr.rel (%p218) target = $region40
        $region39: #{tpu_custom_call.1} parent=35 // pred_region
          %s221 = sand.u32 %s26, 1
          %s222 = scalar_lea.sflag [#allocation3], %s221
          %s223 = sand.u32 %s26, 1
          %s224 = smul.addr %s223, 8
          %s225 = scalar_lea.vmem [#allocation2], %s224
          %227 = vsyncadd %s222, 0
          %s228 = smul.addr %s16, 8
          %s229 = scalar_lea.hbm %s0, %s228
          %s231 = sshll.u32 %s229, 4
          %s232 = int_to_ptr.hbm [resolvable:$true] %s231
          %s233 = sshll.u32 %s225, 4
          %s234 = int_to_ptr.vmem [resolvable:$true] %s233
          %236 = dma.hbm_to_vmem [thread:$0]  %s232, 128, %s234, %s222
        $region40: #{tpu_custom_call.1} parent=35 // pred_fallthru
          _
      $region36: #{tpu_custom_call.1} parent=5 // pred_fallthru
        _
      %p237 = scmp.le.s32.totalorder 1, %s16
      %p238 = scmp.lt.s32.totalorder %s16, 3
      %p239 = pnand %p237, %p238
      %p240 = pneg %p239
      // Predicated region
      $region41: #{tpu_custom_call.1} parent=5 // pred_check
        _
      $region42: #{tpu_custom_call.1} parent=5 // pred_check_branch
        %242 = sbr.rel (%p239) target = $region44
      $region43: #{tpu_custom_call.1} parent=5 // pred_region
        %s243 = ssub.s32 %s16, 1
        %s244 = sand.u32 %s29, 1
        %s245 = scalar_lea.sflag [#allocation3], %s244
        %s246 = sand.u32 %s29, 1
        %s247 = smul.addr %s246, 8
        %s248 = scalar_lea.vmem [#allocation2], %s247
        // Predicated region
        $region45: #{tpu_custom_call.1} parent=43 // pred_check
          %p249 = pneg %p42
        $region46: #{tpu_custom_call.1} parent=43 // pred_check_branch
          %251 = sbr.rel (%p249) target = $region48
        $region47: #{tpu_custom_call.1} parent=43 // pred_region
          %253 = dma.done %s245, 128
        $region48: #{tpu_custom_call.1} parent=43 // pred_fallthru
          _
        // Predicated region
        $region49: #{tpu_custom_call.1} parent=43 // pred_check
          %p254 = pneg %p63
        $region50: #{tpu_custom_call.1} parent=43 // pred_check_branch
          %256 = sbr.rel (%p254) target = $region52
        $region51: #{tpu_custom_call.1} parent=43 // pred_region
          %258 = dma.done [#allocation5], 256
        $region52: #{tpu_custom_call.1} parent=43 // pred_fallthru
          _
        %s259 = sand.u32 %s29, 1
        %s260 = scalar_lea.sflag [#allocation3], %s259
        %s261 = sand.u32 %s29, 1
        %s262 = smul.addr %s261, 8
        %s263 = scalar_lea.vmem [#allocation2], %s262
        %p264 = pneg %p42
        %p265 = pneg %p39
        %p266 = pneg %p63
        %p267 = pneg %p60
        %p268 = pneg %p84
        %p269 = pneg %p81
        %p270 = pneg %p105
        %p271 = pneg %p102
        %p272 = pneg %p126
        %p273 = pneg %p123
        %p274 = pneg %p147
        %p275 = pneg %p144
        %p276 = pneg %p173
        %p277 = pneg %p170
        %p278 = scmp.lt.s32.totalorder %s21, 1
        %s279 = scalar_select %p278, %s21, 1
        %s280 = smul.addr %s279, 8
        %s281 = scalar_lea.vmem %s6, %s280
        %p282 = scmp.lt.s32.totalorder %s21, 1
        %s283 = scalar_select %p282, %s21, 1
        %s284 = smul.addr %s283, 8
        %s285 = scalar_lea.vmem %s6, %s284
        %v287 = vld [vmem:[%s248] sm:$0xff]
        %v288 = vpack.c.bf16 %v287, %v287
        %v289 = vld [vmem:[#allocation4] sm:$0xf]
        %v290 = vld [vmem:[#allocation4 + $0x4] sm:$0xf]
        %v291 = vld [vmem:[#allocation4 + $0x8] sm:$0xf]
        %v292 = vld [vmem:[#allocation4 + $0xc] sm:$0xf]
        %v293 = vld [vmem:[%s4] sm:$0x1]
        %v294 = vperm.slane %v293, 0
        %v299 = vunpack.c.l.b16 %v289
        %v300 = vunpack.c.l.b16 %v290
        %v301 = vunpack.c.l.b16 %v291
        %v302 = vunpack.c.l.b16 %v292
        %v303 = vpack.c.b16 %v300, %v299
        %v304 = vpack.c.b16 %v302, %v301
        %vm307 = vcmask 261120
        %v309 = vsel %vm307, %v288, 0
        %311 = vmatpush.bf16.msra.mxu0 0
        %312 = vmatpush.bf16.msra.mxu0 0
        %313 = vmatpush.bf16.msra.mxu0 0
        %314 = vmatpush.bf16.msra.mxu0 0
        %315 = vmatpush.bf16.msra.mxu0 0
        %316 = vmatpush.bf16.msra.mxu0 0
        %317 = vmatpush.bf16.msra.mxu0 %v304
        %318 = vmatpush.bf16.msra.mxu0 %v303
        %319 = vmatmul.bf16.gmra.mxu0 %v309
        %v320 = vpop.f32.mrf.mxu0
        %v321 = vadd.f32 %v294, %v320
        %v322 = vpop.f32.mrf.mxu0
        %323 = vdwg.mxu0
        %v324 = vmax.f32 %v321, 0.0
        %v325 = vpack.c.bf16 %v324, %v324
        %v326 = vld [vmem:[%s2] sm:$0xf]
        %v327 = vld [vmem:[%s2 + $0x4] sm:$0xf]
        %v328 = vld [vmem:[%s2 + $0x8] sm:$0xf]
        %v329 = vld [vmem:[%s2 + $0xc] sm:$0xf]
        %v330 = vld [vmem:[%s2 + $0x10] sm:$0xf]
        %v331 = vld [vmem:[%s2 + $0x14] sm:$0xf]
        %v332 = vld [vmem:[%s2 + $0x18] sm:$0xf]
        %v333 = vld [vmem:[%s2 + $0x1c] sm:$0xf]
        %v334 = vld [vmem:[%s4 + $0x1] sm:$0x1]
        %v335 = vperm.slane %v334, 0
        %v344 = vunpack.c.l.b16 %v326
        %v345 = vunpack.c.l.b16 %v327
        %v346 = vunpack.c.l.b16 %v328
        %v347 = vunpack.c.l.b16 %v329
        %v348 = vunpack.c.l.b16 %v330
        %v349 = vunpack.c.l.b16 %v331
        %v350 = vunpack.c.l.b16 %v332
        %v351 = vunpack.c.l.b16 %v333
        %v352 = vpack.c.b16 %v345, %v344
        %v353 = vpack.c.b16 %v347, %v346
        %v354 = vpack.c.b16 %v349, %v348
        %v355 = vpack.c.b16 %v351, %v350
        %vm360 = vcmask 523264
        %v362 = vsel %vm360, %v325, 0
        %364 = vmatpush.bf16.msra.mxu0 0
        %365 = vmatpush.bf16.msra.mxu0 0
        %366 = vmatpush.bf16.msra.mxu0 0
        %367 = vmatpush.bf16.msra.mxu0 0
        %368 = vmatpush.bf16.msra.mxu0 %v355
        %369 = vmatpush.bf16.msra.mxu0 %v354
        %370 = vmatpush.bf16.msra.mxu0 %v353
        %371 = vmatpush.bf16.msra.mxu0 %v352
        %372 = vmatmul.bf16.gmra.mxu0 %v362
        %v373 = vpop.f32.mrf.mxu0
        %v374 = vadd.f32 %v335, %v373
        %v375 = vpop.f32.mrf.mxu0
        %376 = vdwg.mxu0
        %v377 = vmax.f32 %v374, 0.0
        %v378 = vpack.c.bf16 %v377, %v377
        %v379 = vld [vmem:[%s3] sm:$0xf]
        %v380 = vld [vmem:[%s3 + $0x4] sm:$0xf]
        %v381 = vld [vmem:[%s3 + $0x8] sm:$0xf]
        %v382 = vld [vmem:[%s3 + $0xc] sm:$0xf]
        %v383 = vld [vmem:[%s3 + $0x10] sm:$0xf]
        %v384 = vld [vmem:[%s3 + $0x14] sm:$0xf]
        %v385 = vld [vmem:[%s3 + $0x18] sm:$0xf]
        %v386 = vld [vmem:[%s3 + $0x1c] sm:$0xf]
        %v387 = vld [vmem:[%s5] sm:$0x1]
        %v389 = vperm.slane %v387, 0
        %v399 = vunpack.c.l.b16 %v379
        %v400 = vunpack.c.l.b16 %v380
        %v401 = vunpack.c.l.b16 %v381
        %v402 = vunpack.c.l.b16 %v382
        %v403 = vunpack.c.l.b16 %v383
        %v404 = vunpack.c.l.b16 %v384
        %v405 = vunpack.c.l.b16 %v385
        %v406 = vunpack.c.l.b16 %v386
        %v407 = vpack.c.b16 %v400, %v399
        %v408 = vpack.c.b16 %v402, %v401
        %v409 = vpack.c.b16 %v404, %v403
        %v410 = vpack.c.b16 %v406, %v405
        %v416 = vsel %vm360, %v378, 0
        %418 = vmatpush.bf16.msra.mxu0 0
        %419 = vmatpush.bf16.msra.mxu0 0
        %420 = vmatpush.bf16.msra.mxu0 0
        %421 = vmatpush.bf16.msra.mxu0 0
        %422 = vmatpush.bf16.msra.mxu0 %v410
        %423 = vmatpush.bf16.msra.mxu0 %v409
        %424 = vmatpush.bf16.msra.mxu0 %v408
        %425 = vmatpush.bf16.msra.mxu0 %v407
        %426 = vmatmul.bf16.gmra.mxu0 %v416
        %v427 = vpop.f32.mrf.mxu0
        %v428 = vadd.f32 %v389, %v427
        %v429 = vpop.f32.mrf.mxu0
        %430 = vdwg.mxu0
        %vm431 = vcmask 64512
        %432 = vst.msk [vmem:[%s285] sm:$0xff] %vm431, %v428
        %p433 = scmp.lt.s32.totalorder %s21, 1
        %s434 = scalar_select %p433, %s21, 1
        %s435 = smul.addr %s434, 8
        %s436 = scalar_lea.vmem %s6, %s435
        // Predicated region
        $region53: #{tpu_custom_call.1} parent=43 // pred_check
          %p437 = pneg %p170
        $region54: #{tpu_custom_call.1} parent=43 // pred_check_branch
          %439 = sbr.rel (%p437) target = $region56
        $region55: #{tpu_custom_call.1} parent=43 // pred_region
          _
        $region56: #{tpu_custom_call.1} parent=43 // pred_fallthru
          _
      $region44: #{tpu_custom_call.1} parent=5 // pred_fallthru
        _
      %p440 = scmp.le.s32.totalorder 2, %s16
      // Predicated region
      $region57: #{tpu_custom_call.1} parent=5 // pred_check
        %p441 = pneg %p440
      $region58: #{tpu_custom_call.1} parent=5 // pred_check_branch
        %443 = sbr.rel (%p441) target = $region60
      $region59: #{tpu_custom_call.1} parent=5 // pred_region
        %s444 = ssub.s32 %s16, 2
        // Predicated region
        $region61: #{tpu_custom_call.1} parent=59 // pred_check
          %p445 = pneg %p176
        $region62: #{tpu_custom_call.1} parent=59 // pred_check_branch
          %447 = sbr.rel (%p445) target = $region64
        $region63: #{tpu_custom_call.1} parent=59 // pred_region
          %p448 = scmp.lt.s32.totalorder %s22, 1
          %s449 = scalar_select %p448, %s22, 1
          %s450 = smul.addr %s449, 8
          %s451 = scalar_lea.vmem %s6, %s450
        $region64: #{tpu_custom_call.1} parent=59 // pred_fallthru
          _
      $region60: #{tpu_custom_call.1} parent=5 // pred_fallthru
        _
    $region6: #{tpu_custom_call.1} parent=1 // loop_footer
      %s20 = sadd.s32 1, %s16
    $region7: #{tpu_custom_call.1} parent=1 // loop_footer_branch
      %15 = sbr.rel target = $region3
    $region8: #{tpu_custom_call.1} parent=1 // loop_exit
      _
    %452 = vsyncpa [#allocation3], 1
    %s453 = scalar_lea.sflag [#allocation3], 1
    %454 = vsyncpa %s453, 1
    %455 = vsyncpa [#allocation5], 1

</llo_original>
